<compile_context>
chip_gen: v7x
topology: tpu7x:2x2x1
jax: 0.10.0
libtpu: 0.0.40
codegen_flags: <defaults>
</compile_context>

<pallas_src>
import functools

import jax
import jax.numpy as jnp
from jax.experimental import pallas as pl
from jax.experimental.pallas import tpu as pltpu

LEAKY_SLOPE = 0.01  # default negative_slope of torch.nn.functional.leaky_relu


def _leaky(v):
    return jnp.where(v >= 0.0, v, LEAKY_SLOPE * v)


# ---------------------------------------------------------------------------
# Kernels
# ---------------------------------------------------------------------------

def _fused_pool_kernel(x_ref, o_ref, t_ref):
    """Fully fused LeakyReLU + 2x2 max-pool.

    x_ref: (bp, 2, W)   bp pairs of vertically adjacent rows (same image & channel)
    o_ref: (bp, W//2)
    t_ref: (W, bp)      VMEM scratch holding the row-pooled tile transposed so the
                        even/odd column selection becomes stride-2 sublane reads.
    """
    top = x_ref[:, 0, :]
    bot = x_ref[:, 1, :]
    hmax = jnp.maximum(top, bot)                 # vertical (H) pool      (bp, W)
    t_ref[...] = hmax.T                          # W -> sublanes          (W, bp)
    half = o_ref.shape[1]
    even_cols = t_ref[pl.ds(0, half, 2), :]      # columns 0, 2, 4, ...   (W//2, bp)
    odd_cols = t_ref[pl.ds(1, half, 2), :]       # columns 1, 3, 5, ...
    pooled = jnp.maximum(even_cols, odd_cols).T  # horizontal (W) pool    (bp, W//2)
    o_ref[...] = _leaky(pooled)                  # leaky commutes with max (exact)


def _rowpool_kernel(x_ref, o_ref):
    """Fallback kernel: LeakyReLU + vertical pool (horizontal 2-max finished by XLA)."""
    top = x_ref[:, 0, :]
    bot = x_ref[:, 1, :]
    o_ref[...] = _leaky(jnp.maximum(top, bot))


# ---------------------------------------------------------------------------
# Wrappers
# ---------------------------------------------------------------------------

def _pick_block_rows(p, w, budget_bytes=4 * 1024 * 1024):
    """Largest divisor of p (preferring multiples of 8) whose padded block fits ~4 MiB."""
    padded_w = ((w + 127) // 128) * 128
    cap = max(1, min(p, budget_bytes // (8 * padded_w * 4)))
    best, best8 = 1, 0
    for d in range(1, cap + 1):
        if p % d == 0:
            best = d
            if d % 8 == 0:
                best8 = d
    return best8 or best


def downsample_fused(x):
    """x: (N, C, H, W) float32 -> (N, C, H//2, W//2).  Single fused Pallas kernel."""
    n, c, h, w = x.shape
    assert h % 2 == 0 and w % 2 == 0, "MaxPool2d(2, 2) needs even spatial dims"
    p = n * c * (h // 2)
    bp = _pick_block_rows(p, w)
    x2 = x.reshape(p, 2, w)                      # free, contiguous reshape of NCHW
    out = pl.pallas_call(
        _fused_pool_kernel,
        out_shape=jax.ShapeDtypeStruct((p, w // 2), x.dtype),
        grid=(p // bp,),
        in_specs=[pl.BlockSpec((bp, 2, w), lambda i: (i, 0, 0))],
        out_specs=pl.BlockSpec((bp, w // 2), lambda i: (i, 0)),
        scratch_shapes=[pltpu.VMEM((w, bp), jnp.float32)],
        compiler_params=pltpu.CompilerParams(dimension_semantics=("parallel",)),
    )(x2)
    return out.reshape(n, c, h // 2, w // 2)


def downsample_fallback(x):
    """Fallback: Pallas fuses LeakyReLU + H-pool; XLA does the final 2-wide W max."""
    n, c, h, w = x.shape
    assert h % 2 == 0 and w % 2 == 0
    p = n * c * (h // 2)
    bp = _pick_block_rows(p, w)
    x2 = x.reshape(p, 2, w)
    rows = pl.pallas_call(
        _rowpool_kernel,
        out_shape=jax.ShapeDtypeStruct((p, w), x.dtype),
        grid=(p // bp,),
        in_specs=[pl.BlockSpec((bp, 2, w), lambda i: (i, 0, 0))],
        out_specs=pl.BlockSpec((bp, w), lambda i: (i, 0)),
        compiler_params=pltpu.CompilerParams(dimension_semantics=("parallel",)),
    )(x2)
    out = jnp.maximum(rows[:, 0::2], rows[:, 1::2])
    return out.reshape(n, c, h // 2, w // 2)


class BrightDownSample:
    """Pallas equivalent of the PyTorch Bright_DownSample module (forward only)."""

    def __init__(self, channel=None, fused=True):
        del channel                               # unused by the reference module as well
        self._fn = downsample_fused if fused else downsample_fallback

    def __call__(self, x):
        return self._fn(x)


def _reference(x):
    """Pure-JAX reference: F.leaky_relu followed by nn.MaxPool2d(2, 2)."""
    x = _leaky(x)
    n, c, h, w = x.shape
    return x.reshape(n, c, h // 2, 2, w // 2, 2).max(axis=(3, 5))


if __name__ == "__main__":
    key = jax.random.PRNGKey(0)
    x = jax.random.normal(key, (2, 4, 16, 16), jnp.float32)  # NCHW, like the torch module
    expected = _reference(x)

    out = None
    try:
        out = jax.block_until_ready(jax.jit(downsample_fused)(x))
        if out.shape != expected.shape or not bool(
            jnp.allclose(out, expected, rtol=1e-6, atol=1e-6)
        ):
            out = None
    except Exception:
        # Stride-2 sublane reads not supported by this Mosaic build -> use the safe kernel.
        out = None

    if out is None:
        out = jax.block_until_ready(jax.jit(downsample_fallback)(x))

    assert out.shape == (2, 4, 8, 8), out.shape
    assert bool(jnp.allclose(out, expected, rtol=1e-6, atol=1e-6))
    assert bool(jnp.all(jnp.isfinite(out)))
    print("KERNEL_OK")
</pallas_src>

<mosaic_0001>
module attributes {stable_mosaic.version = 11 : i64} {
  func.func @_fused_pool_kernel(%arg0: i32, %arg1: memref<64x2x16xf32, #tpu.memory_space<vmem>>, %arg2: memref<64x8xf32, #tpu.memory_space<vmem>>, %arg3: memref<16x64xf32, #tpu.memory_space<vmem>>) attributes {dimension_semantics = [#tpu.dimension_semantics<parallel>], iteration_bounds = array<i64: 1>, scalar_prefetch = 0 : i64, scratch_operands = 1 : i64, tpu.core_type = #tpu.core_type<tc>, window_params = [{transform_indices = @transform_0, window_bounds = array<i64: 64, 2, 16>}, {transform_indices = @transform_1, window_bounds = array<i64: 64, 8>}]} {
    %c0 = arith.constant 0 : index
    %c0_0 = arith.constant 0 : index
    %c0_1 = arith.constant 0 : index
    %0 = vector.load %arg1[%c0, %c0_0, %c0_1] : memref<64x2x16xf32, #tpu.memory_space<vmem>>, vector<64x1x16xf32>
    %1 = vector.shape_cast %0 : vector<64x1x16xf32> to vector<64x16xf32>
    %c0_2 = arith.constant 0 : index
    %c1 = arith.constant 1 : index
    %c0_3 = arith.constant 0 : index
    %2 = vector.load %arg1[%c0_2, %c1, %c0_3] : memref<64x2x16xf32, #tpu.memory_space<vmem>>, vector<64x1x16xf32>
    %3 = vector.shape_cast %2 : vector<64x1x16xf32> to vector<64x16xf32>
    %4 = arith.maximumf %1, %3 : vector<64x16xf32>
    %5 = tpu.transpose %4, [1, 0] : vector<64x16xf32> -> vector<16x64xf32>
    %c0_4 = arith.constant 0 : index
    %c0_5 = arith.constant 0 : index
    %6 = vector.load %arg3[%c0_4, %c0_5] : memref<16x64xf32, #tpu.memory_space<vmem>>, vector<16x64xf32>
    tpu.vector_store %arg3[%c0_4, %c0_5], %5 {strides = array<i32>} : memref<16x64xf32, #tpu.memory_space<vmem>>, vector<16x64xf32>,
    %c0_6 = arith.constant 0 : index
    %c0_7 = arith.constant 0 : index
    %7 = tpu.strided_load %arg3[%c0_6, %c0_7] {strides = array<i32: 2, 1>} : memref<16x64xf32, #tpu.memory_space<vmem>>, vector<8x64xf32>
    %c1_8 = arith.constant 1 : index
    %c0_9 = arith.constant 0 : index
    %8 = tpu.strided_load %arg3[%c1_8, %c0_9] {strides = array<i32: 2, 1>} : memref<16x64xf32, #tpu.memory_space<vmem>>, vector<8x64xf32>
    %9 = arith.maximumf %7, %8 : vector<8x64xf32>
    %10 = tpu.transpose %9, [1, 0] : vector<8x64xf32> -> vector<64x8xf32>
    %cst = arith.constant 0.000000e+00 : f32
    %11 = vector.broadcast %cst : f32 to vector<64x8xf32>
    %12 = arith.cmpf oge, %10, %11 : vector<64x8xf32>
    %cst_10 = arith.constant 0.00999999977 : f32
    %13 = vector.broadcast %cst_10 : f32 to vector<64x8xf32>
    %14 = arith.mulf %13, %10 : vector<64x8xf32>
    %15 = arith.select %12, %10, %14 : vector<64x8xi1>, vector<64x8xf32>
    %c0_11 = arith.constant 0 : index
    %c0_12 = arith.constant 0 : index
    %16 = vector.load %arg2[%c0_11, %c0_12] : memref<64x8xf32, #tpu.memory_space<vmem>>, vector<64x8xf32>
    tpu.vector_store %arg2[%c0_11, %c0_12], %15 {strides = array<i32>} : memref<64x8xf32, #tpu.memory_space<vmem>>, vector<64x8xf32>,
    return
  }
  func.func @transform_0(%arg0: i32) -> (i32, i32, i32) {
    %c0_i32 = arith.constant 0 : i32
    %c0_i32_0 = arith.constant 0 : i32
    %c0_i32_1 = arith.constant 0 : i32
    return %arg0, %c0_i32, %c0_i32_0 : i32, i32, i32
  }
  func.func @transform_1(%arg0: i32) -> (i32, i32) {
    %c0_i32 = arith.constant 0 : i32
    %c0_i32_0 = arith.constant 0 : i32
    return %arg0, %c0_i32 : i32, i32
  }
}

module attributes {stable_mosaic.version = 11 : i64} {
  func.func @_rowpool_kernel(%arg0: i32, %arg1: memref<64x2x16xf32, #tpu.memory_space<vmem>>, %arg2: memref<64x16xf32, #tpu.memory_space<vmem>>) attributes {dimension_semantics = [#tpu.dimension_semantics<parallel>], iteration_bounds = array<i64: 1>, scalar_prefetch = 0 : i64, scratch_operands = 0 : i64, tpu.core_type = #tpu.core_type<tc>, window_params = [{transform_indices = @transform_0, window_bounds = array<i64: 64, 2, 16>}, {transform_indices = @transform_1, window_bounds = array<i64: 64, 16>}]} {
    %c0 = arith.constant 0 : index
    %c0_0 = arith.constant 0 : index
    %c0_1 = arith.constant 0 : index
    %0 = vector.load %arg1[%c0, %c0_0, %c0_1] : memref<64x2x16xf32, #tpu.memory_space<vmem>>, vector<64x1x16xf32>
    %1 = vector.shape_cast %0 : vector<64x1x16xf32> to vector<64x16xf32>
    %c0_2 = arith.constant 0 : index
    %c1 = arith.constant 1 : index
    %c0_3 = arith.constant 0 : index
    %2 = vector.load %arg1[%c0_2, %c1, %c0_3] : memref<64x2x16xf32, #tpu.memory_space<vmem>>, vector<64x1x16xf32>
    %3 = vector.shape_cast %2 : vector<64x1x16xf32> to vector<64x16xf32>
    %4 = arith.maximumf %1, %3 : vector<64x16xf32>
    %cst = arith.constant 0.000000e+00 : f32
    %5 = vector.broadcast %cst : f32 to vector<64x16xf32>
    %6 = arith.cmpf oge, %4, %5 : vector<64x16xf32>
    %cst_4 = arith.constant 0.00999999977 : f32
    %7 = vector.broadcast %cst_4 : f32 to vector<64x16xf32>
    %8 = arith.mulf %7, %4 : vector<64x16xf32>
    %9 = arith.select %6, %4, %8 : vector<64x16xi1>, vector<64x16xf32>
    %c0_5 = arith.constant 0 : index
    %c0_6 = arith.constant 0 : index
    %10 = vector.load %arg2[%c0_5, %c0_6] : memref<64x16xf32, #tpu.memory_space<vmem>>, vector<64x16xf32>
    tpu.vector_store %arg2[%c0_5, %c0_6], %9 {strides = array<i32>} : memref<64x16xf32, #tpu.memory_space<vmem>>, vector<64x16xf32>,
    return
  }
  func.func @transform_0(%arg0: i32) -> (i32, i32, i32) {
    %c0_i32 = arith.constant 0 : i32
    %c0_i32_0 = arith.constant 0 : i32
    %c0_i32_1 = arith.constant 0 : i32
    return %arg0, %c0_i32, %c0_i32_0 : i32, i32, i32
  }
  func.func @transform_1(%arg0: i32) -> (i32, i32) {
    %c0_i32 = arith.constant 0 : i32
    %c0_i32_0 = arith.constant 0 : i32
    return %arg0, %c0_i32 : i32, i32
  }
}

</mosaic_0001>

<llo_original>
// kernel: downsample_fused.1
$region0: #{downsample_fused.1}
  #allocation0 [shape = 'u32[]', space=smem, size = 0x4, offset = 0x4, fixed_abs, tag = 'smem constant byte address 0x4 - core index']
  #allocation1 [shape = 'u32[144,128]{1,0:T(1,128)}', space=vmem, size = 0x12000, scoped, tag = 'internal scratch']
  #allocation2 [shape = 'f32[16,64]{1,0:T(8,128)}', space=vmem, size = 0x2000, scoped, tag = 'scratch operand']
  %s0 = inlined_call_operand.hbm [shape: f32[64,2,16], index: 0, kind: input, shape index: {}]
  %s1 = inlined_call_operand.hbm [shape: f32[64,8], index: 1, kind: output, shape index: {}]
  %s2 = sld [smem:[#allocation0]]
  $region18: #{downsample_fused.1} parent=0
    _
  %s4 = ssub.s32 1, %s2
  %s5 = scalar_select 0, %s4, %s2
  $region1: #{downsample_fused.1} parent=0
    #allocation3 [shape = 'u8[65536]{0}', space=vmem, size = 0x10000, scoped, tag = 'input window, operand 0, single buffered']
    #allocation4 [shape = 's32[1]{0}', space=sflag, size = 0x4, scoped, tag = 'scoped memory for downsample_fused.1']
    #allocation5 [shape = 's32[1]{0}', space=sflag, size = 0x4, scoped, tag = 'scoped memory for downsample_fused.1']
    #allocation6 [shape = 'u8[32768]{0}', space=vmem, size = 0x8000, scoped, tag = 'output window, operand 0, single buffered']
    %6 = vsyncpa [#allocation4], 0
    %7 = vsyncpa [#allocation5], 0
    // Predicated region
    $region2: #{downsample_fused.1} parent=1 // pred_check
      _
    $region3: #{downsample_fused.1} parent=1 // pred_check_branch
      %9 = sbr.rel (0) target = $region5
    $region4: #{downsample_fused.1} parent=1 // pred_region
      %s11 = ssub.s32 2048, 2048
      %12 = vsyncadd [#allocation4], %s11
      %s13 = sshll.u32 [#allocation3], 4
      %s14 = int_to_ptr.vmem [resolvable:$true] %s13
      %19 = dma.hbm_to_vmem [thread:$0]  %s0, 2048, %s14, [#allocation4], 32, 32, 2
    $region5: #{downsample_fused.1} parent=1 // pred_fallthru
      _
    // Predicated region
    $region6: #{downsample_fused.1} parent=1 // pred_check
      _
    $region7: #{downsample_fused.1} parent=1 // pred_check_branch
      %21 = sbr.rel (0) target = $region9
    $region8: #{downsample_fused.1} parent=1 // pred_region
      %22 = dma.done [#allocation4], 2048
    $region9: #{downsample_fused.1} parent=1 // pred_fallthru
      _
    %v23 = vld [vmem:[#allocation3] sm:$0x1]
    %v24 = vld [vmem:[#allocation3 + $0x2] sm:$0x1]
    %v25 = vld [vmem:[#allocation3 + $0x4] sm:$0x1]
    %v26 = vld [vmem:[#allocation3 + $0x6] sm:$0x1]
    %v27 = vld [vmem:[#allocation3 + $0x8] sm:$0x1]
    %v28 = vld [vmem:[#allocation3 + $0xa] sm:$0x1]
    %v29 = vld [vmem:[#allocation3 + $0xc] sm:$0x1]
    %v30 = vld [vmem:[#allocation3 + $0xe] sm:$0x1]
    %v31 = vld [vmem:[#allocation3 + $0x10] sm:$0x1]
    %v32 = vld [vmem:[#allocation3 + $0x12] sm:$0x1]
    %v33 = vld [vmem:[#allocation3 + $0x14] sm:$0x1]
    %v34 = vld [vmem:[#allocation3 + $0x16] sm:$0x1]
    %v35 = vld [vmem:[#allocation3 + $0x18] sm:$0x1]
    %v36 = vld [vmem:[#allocation3 + $0x1a] sm:$0x1]
    %v37 = vld [vmem:[#allocation3 + $0x1c] sm:$0x1]
    %v38 = vld [vmem:[#allocation3 + $0x1e] sm:$0x1]
    %v39 = vld [vmem:[#allocation3 + $0x20] sm:$0x1]
    %v40 = vld [vmem:[#allocation3 + $0x22] sm:$0x1]
    %v41 = vld [vmem:[#allocation3 + $0x24] sm:$0x1]
    %v42 = vld [vmem:[#allocation3 + $0x26] sm:$0x1]
    %v43 = vld [vmem:[#allocation3 + $0x28] sm:$0x1]
    %v44 = vld [vmem:[#allocation3 + $0x2a] sm:$0x1]
    %v45 = vld [vmem:[#allocation3 + $0x2c] sm:$0x1]
    %v46 = vld [vmem:[#allocation3 + $0x2e] sm:$0x1]
    %v47 = vld [vmem:[#allocation3 + $0x30] sm:$0x1]
    %v48 = vld [vmem:[#allocation3 + $0x32] sm:$0x1]
    %v49 = vld [vmem:[#allocation3 + $0x34] sm:$0x1]
    %v50 = vld [vmem:[#allocation3 + $0x36] sm:$0x1]
    %v51 = vld [vmem:[#allocation3 + $0x38] sm:$0x1]
    %v52 = vld [vmem:[#allocation3 + $0x3a] sm:$0x1]
    %v53 = vld [vmem:[#allocation3 + $0x3c] sm:$0x1]
    %v54 = vld [vmem:[#allocation3 + $0x3e] sm:$0x1]
    %v55 = vld [vmem:[#allocation3 + $0x40] sm:$0x1]
    %v56 = vld [vmem:[#allocation3 + $0x42] sm:$0x1]
    %v57 = vld [vmem:[#allocation3 + $0x44] sm:$0x1]
    %v58 = vld [vmem:[#allocation3 + $0x46] sm:$0x1]
    %v59 = vld [vmem:[#allocation3 + $0x48] sm:$0x1]
    %v60 = vld [vmem:[#allocation3 + $0x4a] sm:$0x1]
    %v61 = vld [vmem:[#allocation3 + $0x4c] sm:$0x1]
    %v62 = vld [vmem:[#allocation3 + $0x4e] sm:$0x1]
    %v63 = vld [vmem:[#allocation3 + $0x50] sm:$0x1]
    %v64 = vld [vmem:[#allocation3 + $0x52] sm:$0x1]
    %v65 = vld [vmem:[#allocation3 + $0x54] sm:$0x1]
    %v66 = vld [vmem:[#allocation3 + $0x56] sm:$0x1]
    %v67 = vld [vmem:[#allocation3 + $0x58] sm:$0x1]
    %v68 = vld [vmem:[#allocation3 + $0x5a] sm:$0x1]
    %v69 = vld [vmem:[#allocation3 + $0x5c] sm:$0x1]
    %v70 = vld [vmem:[#allocation3 + $0x5e] sm:$0x1]
    %v71 = vld [vmem:[#allocation3 + $0x60] sm:$0x1]
    %v72 = vld [vmem:[#allocation3 + $0x62] sm:$0x1]
    %v73 = vld [vmem:[#allocation3 + $0x64] sm:$0x1]
    %v74 = vld [vmem:[#allocation3 + $0x66] sm:$0x1]
    %v75 = vld [vmem:[#allocation3 + $0x68] sm:$0x1]
    %v76 = vld [vmem:[#allocation3 + $0x6a] sm:$0x1]
    %v77 = vld [vmem:[#allocation3 + $0x6c] sm:$0x1]
    %v78 = vld [vmem:[#allocation3 + $0x6e] sm:$0x1]
    %v79 = vld [vmem:[#allocation3 + $0x70] sm:$0x1]
    %v80 = vld [vmem:[#allocation3 + $0x72] sm:$0x1]
    %v81 = vld [vmem:[#allocation3 + $0x74] sm:$0x1]
    %v82 = vld [vmem:[#allocation3 + $0x76] sm:$0x1]
    %v83 = vld [vmem:[#allocation3 + $0x78] sm:$0x1]
    %v84 = vld [vmem:[#allocation3 + $0x7a] sm:$0x1]
    %v85 = vld [vmem:[#allocation3 + $0x7c] sm:$0x1]
    %v86 = vld [vmem:[#allocation3 + $0x7e] sm:$0x1]
    %v87 = vld [vmem:[#allocation3 + $0x1] sm:$0x1]
    %v88 = vld [vmem:[#allocation3 + $0x3] sm:$0x1]
    %v89 = vld [vmem:[#allocation3 + $0x5] sm:$0x1]
    %v90 = vld [vmem:[#allocation3 + $0x7] sm:$0x1]
    %v91 = vld [vmem:[#allocation3 + $0x9] sm:$0x1]
    %v92 = vld [vmem:[#allocation3 + $0xb] sm:$0x1]
    %v93 = vld [vmem:[#allocation3 + $0xd] sm:$0x1]
    %v94 = vld [vmem:[#allocation3 + $0xf] sm:$0x1]
    %v95 = vld [vmem:[#allocation3 + $0x11] sm:$0x1]
    %v96 = vld [vmem:[#allocation3 + $0x13] sm:$0x1]
    %v97 = vld [vmem:[#allocation3 + $0x15] sm:$0x1]
    %v98 = vld [vmem:[#allocation3 + $0x17] sm:$0x1]
    %v99 = vld [vmem:[#allocation3 + $0x19] sm:$0x1]
    %v100 = vld [vmem:[#allocation3 + $0x1b] sm:$0x1]
    %v101 = vld [vmem:[#allocation3 + $0x1d] sm:$0x1]
    %v102 = vld [vmem:[#allocation3 + $0x1f] sm:$0x1]
    %v103 = vld [vmem:[#allocation3 + $0x21] sm:$0x1]
    %v104 = vld [vmem:[#allocation3 + $0x23] sm:$0x1]
    %v105 = vld [vmem:[#allocation3 + $0x25] sm:$0x1]
    %v106 = vld [vmem:[#allocation3 + $0x27] sm:$0x1]
    %v107 = vld [vmem:[#allocation3 + $0x29] sm:$0x1]
    %v108 = vld [vmem:[#allocation3 + $0x2b] sm:$0x1]
    %v109 = vld [vmem:[#allocation3 + $0x2d] sm:$0x1]
    %v110 = vld [vmem:[#allocation3 + $0x2f] sm:$0x1]
    %v111 = vld [vmem:[#allocation3 + $0x31] sm:$0x1]
    %v112 = vld [vmem:[#allocation3 + $0x33] sm:$0x1]
    %v113 = vld [vmem:[#allocation3 + $0x35] sm:$0x1]
    %v114 = vld [vmem:[#allocation3 + $0x37] sm:$0x1]
    %v115 = vld [vmem:[#allocation3 + $0x39] sm:$0x1]
    %v116 = vld [vmem:[#allocation3 + $0x3b] sm:$0x1]
    %v117 = vld [vmem:[#allocation3 + $0x3d] sm:$0x1]
    %v118 = vld [vmem:[#allocation3 + $0x3f] sm:$0x1]
    %v119 = vld [vmem:[#allocation3 + $0x41] sm:$0x1]
    %v120 = vld [vmem:[#allocation3 + $0x43] sm:$0x1]
    %v121 = vld [vmem:[#allocation3 + $0x45] sm:$0x1]
    %v122 = vld [vmem:[#allocation3 + $0x47] sm:$0x1]
    %v123 = vld [vmem:[#allocation3 + $0x49] sm:$0x1]
    %v124 = vld [vmem:[#allocation3 + $0x4b] sm:$0x1]
    %v125 = vld [vmem:[#allocation3 + $0x4d] sm:$0x1]
    %v126 = vld [vmem:[#allocation3 + $0x4f] sm:$0x1]
    %v127 = vld [vmem:[#allocation3 + $0x51] sm:$0x1]
    %v128 = vld [vmem:[#allocation3 + $0x53] sm:$0x1]
    %v129 = vld [vmem:[#allocation3 + $0x55] sm:$0x1]
    %v130 = vld [vmem:[#allocation3 + $0x57] sm:$0x1]
    %v131 = vld [vmem:[#allocation3 + $0x59] sm:$0x1]
    %v132 = vld [vmem:[#allocation3 + $0x5b] sm:$0x1]
    %v133 = vld [vmem:[#allocation3 + $0x5d] sm:$0x1]
    %v134 = vld [vmem:[#allocation3 + $0x5f] sm:$0x1]
    %v135 = vld [vmem:[#allocation3 + $0x61] sm:$0x1]
    %v136 = vld [vmem:[#allocation3 + $0x63] sm:$0x1]
    %v137 = vld [vmem:[#allocation3 + $0x65] sm:$0x1]
    %v138 = vld [vmem:[#allocation3 + $0x67] sm:$0x1]
    %v139 = vld [vmem:[#allocation3 + $0x69] sm:$0x1]
    %v140 = vld [vmem:[#allocation3 + $0x6b] sm:$0x1]
    %v141 = vld [vmem:[#allocation3 + $0x6d] sm:$0x1]
    %v142 = vld [vmem:[#allocation3 + $0x6f] sm:$0x1]
    %v143 = vld [vmem:[#allocation3 + $0x71] sm:$0x1]
    %v144 = vld [vmem:[#allocation3 + $0x73] sm:$0x1]
    %v145 = vld [vmem:[#allocation3 + $0x75] sm:$0x1]
    %v146 = vld [vmem:[#allocation3 + $0x77] sm:$0x1]
    %v147 = vld [vmem:[#allocation3 + $0x79] sm:$0x1]
    %v148 = vld [vmem:[#allocation3 + $0x7b] sm:$0x1]
    %v149 = vld [vmem:[#allocation3 + $0x7d] sm:$0x1]
    %v150 = vld [vmem:[#allocation3 + $0x7f] sm:$0x1]
    %v151 = vmax.f32 %v23, %v87
    %v152 = vmax.f32 %v24, %v88
    %v153 = vmax.f32 %v25, %v89
    %v154 = vmax.f32 %v26, %v90
    %v155 = vmax.f32 %v27, %v91
    %v156 = vmax.f32 %v28, %v92
    %v157 = vmax.f32 %v29, %v93
    %v158 = vmax.f32 %v30, %v94
    %v159 = vmax.f32 %v31, %v95
    %v160 = vmax.f32 %v32, %v96
    %v161 = vmax.f32 %v33, %v97
    %v162 = vmax.f32 %v34, %v98
    %v163 = vmax.f32 %v35, %v99
    %v164 = vmax.f32 %v36, %v100
    %v165 = vmax.f32 %v37, %v101
    %v166 = vmax.f32 %v38, %v102
    %v167 = vmax.f32 %v39, %v103
    %v168 = vmax.f32 %v40, %v104
    %v169 = vmax.f32 %v41, %v105
    %v170 = vmax.f32 %v42, %v106
    %v171 = vmax.f32 %v43, %v107
    %v172 = vmax.f32 %v44, %v108
    %v173 = vmax.f32 %v45, %v109
    %v174 = vmax.f32 %v46, %v110
    %v175 = vmax.f32 %v47, %v111
    %v176 = vmax.f32 %v48, %v112
    %v177 = vmax.f32 %v49, %v113
    %v178 = vmax.f32 %v50, %v114
    %v179 = vmax.f32 %v51, %v115
    %v180 = vmax.f32 %v52, %v116
    %v181 = vmax.f32 %v53, %v117
    %v182 = vmax.f32 %v54, %v118
    %v183 = vmax.f32 %v55, %v119
    %v184 = vmax.f32 %v56, %v120
    %v185 = vmax.f32 %v57, %v121
    %v186 = vmax.f32 %v58, %v122
    %v187 = vmax.f32 %v59, %v123
    %v188 = vmax.f32 %v60, %v124
    %v189 = vmax.f32 %v61, %v125
    %v190 = vmax.f32 %v62, %v126
    %v191 = vmax.f32 %v63, %v127
    %v192 = vmax.f32 %v64, %v128
    %v193 = vmax.f32 %v65, %v129
    %v194 = vmax.f32 %v66, %v130
    %v195 = vmax.f32 %v67, %v131
    %v196 = vmax.f32 %v68, %v132
    %v197 = vmax.f32 %v69, %v133
    %v198 = vmax.f32 %v70, %v134
    %v199 = vmax.f32 %v71, %v135
    %v200 = vmax.f32 %v72, %v136
    %v201 = vmax.f32 %v73, %v137
    %v202 = vmax.f32 %v74, %v138
    %v203 = vmax.f32 %v75, %v139
    %v204 = vmax.f32 %v76, %v140
    %v205 = vmax.f32 %v77, %v141
    %v206 = vmax.f32 %v78, %v142
    %v207 = vmax.f32 %v79, %v143
    %v208 = vmax.f32 %v80, %v144
    %v209 = vmax.f32 %v81, %v145
    %v210 = vmax.f32 %v82, %v146
    %v211 = vmax.f32 %v83, %v147
    %v212 = vmax.f32 %v84, %v148
    %v213 = vmax.f32 %v85, %v149
    %v214 = vmax.f32 %v86, %v150
    %v279 = vrot.slane %v152, 7
    %vm280 = vcmask 1041409
    %v281 = vsel %vm280, %v279, %v151
    %v282 = vrot.slane %v153, 6
    %vm283 = vcmask 1042434
    %v284 = vsel %vm283, %v282, %v281
    %v285 = vrot.slane %v154, 5
    %vm286 = vcmask 1043459
    %v287 = vsel %vm286, %v285, %v284
    %v288 = vrot.slane %v155, 4
    %vm289 = vcmask 1044484
    %v290 = vsel %vm289, %v288, %v287
    %v291 = vrot.slane %v156, 3
    %vm292 = vcmask 1045509
    %v293 = vsel %vm292, %v291, %v290
    %v294 = vrot.slane %v157, 2
    %vm295 = vcmask 1046534
    %v296 = vsel %vm295, %v294, %v293
    %v297 = vrot.slane %v158, 1
    %vm298 = vcmask 1047559
    %v299 = vsel %vm298, %v297, %v296
    %v300 = vrot.slane %v160, 7
    %v301 = vsel %vm280, %v300, %v159
    %v302 = vrot.slane %v161, 6
    %v303 = vsel %vm283, %v302, %v301
    %v304 = vrot.slane %v162, 5
    %v305 = vsel %vm286, %v304, %v303
    %v306 = vrot.slane %v163, 4
    %v307 = vsel %vm289, %v306, %v305
    %v308 = vrot.slane %v164, 3
    %v309 = vsel %vm292, %v308, %v307
    %v310 = vrot.slane %v165, 2
    %v311 = vsel %vm295, %v310, %v309
    %v312 = vrot.slane %v166, 1
    %v313 = vsel %vm298, %v312, %v311
    %v314 = vrot.slane %v168, 7
    %v315 = vsel %vm280, %v314, %v167
    %v316 = vrot.slane %v169, 6
    %v317 = vsel %vm283, %v316, %v315
    %v318 = vrot.slane %v170, 5
    %v319 = vsel %vm286, %v318, %v317
    %v320 = vrot.slane %v171, 4
    %v321 = vsel %vm289, %v320, %v319
    %v322 = vrot.slane %v172, 3
    %v323 = vsel %vm292, %v322, %v321
    %v324 = vrot.slane %v173, 2
    %v325 = vsel %vm295, %v324, %v323
    %v326 = vrot.slane %v174, 1
    %v327 = vsel %vm298, %v326, %v325
    %v328 = vrot.slane %v176, 7
    %v329 = vsel %vm280, %v328, %v175
    %v330 = vrot.slane %v177, 6
    %v331 = vsel %vm283, %v330, %v329
    %v332 = vrot.slane %v178, 5
    %v333 = vsel %vm286, %v332, %v331
    %v334 = vrot.slane %v179, 4
    %v335 = vsel %vm289, %v334, %v333
    %v336 = vrot.slane %v180, 3
    %v337 = vsel %vm292, %v336, %v335
    %v338 = vrot.slane %v181, 2
    %v339 = vsel %vm295, %v338, %v337
    %v340 = vrot.slane %v182, 1
    %v341 = vsel %vm298, %v340, %v339
    %v342 = vrot.slane %v184, 7
    %v343 = vsel %vm280, %v342, %v183
    %v344 = vrot.slane %v185, 6
    %v345 = vsel %vm283, %v344, %v343
    %v346 = vrot.slane %v186, 5
    %v347 = vsel %vm286, %v346, %v345
    %v348 = vrot.slane %v187, 4
    %v349 = vsel %vm289, %v348, %v347
    %v350 = vrot.slane %v188, 3
    %v351 = vsel %vm292, %v350, %v349
    %v352 = vrot.slane %v189, 2
    %v353 = vsel %vm295, %v352, %v351
    %v354 = vrot.slane %v190, 1
    %v355 = vsel %vm298, %v354, %v353
    %v356 = vrot.slane %v192, 7
    %v357 = vsel %vm280, %v356, %v191
    %v358 = vrot.slane %v193, 6
    %v359 = vsel %vm283, %v358, %v357
    %v360 = vrot.slane %v194, 5
    %v361 = vsel %vm286, %v360, %v359
    %v362 = vrot.slane %v195, 4
    %v363 = vsel %vm289, %v362, %v361
    %v364 = vrot.slane %v196, 3
    %v365 = vsel %vm292, %v364, %v363
    %v366 = vrot.slane %v197, 2
    %v367 = vsel %vm295, %v366, %v365
    %v368 = vrot.slane %v198, 1
    %v369 = vsel %vm298, %v368, %v367
    %v370 = vrot.slane %v200, 7
    %v371 = vsel %vm280, %v370, %v199
    %v372 = vrot.slane %v201, 6
    %v373 = vsel %vm283, %v372, %v371
    %v374 = vrot.slane %v202, 5
    %v375 = vsel %vm286, %v374, %v373
    %v376 = vrot.slane %v203, 4
    %v377 = vsel %vm289, %v376, %v375
    %v378 = vrot.slane %v204, 3
    %v379 = vsel %vm292, %v378, %v377
    %v380 = vrot.slane %v205, 2
    %v381 = vsel %vm295, %v380, %v379
    %v382 = vrot.slane %v206, 1
    %v383 = vsel %vm298, %v382, %v381
    %v384 = vrot.slane %v208, 7
    %v385 = vsel %vm280, %v384, %v207
    %v386 = vrot.slane %v209, 6
    %v387 = vsel %vm283, %v386, %v385
    %v388 = vrot.slane %v210, 5
    %v389 = vsel %vm286, %v388, %v387
    %v390 = vrot.slane %v211, 4
    %v391 = vsel %vm289, %v390, %v389
    %v392 = vrot.slane %v212, 3
    %v393 = vsel %vm292, %v392, %v391
    %v394 = vrot.slane %v213, 2
    %v395 = vsel %vm295, %v394, %v393
    %v396 = vrot.slane %v214, 1
    %v397 = vsel %vm298, %v396, %v395
    %406 = vxpose.xlu0.b32.start [1/16] %v299, 128
    %407 = vxpose.xlu0.b32.cont [2/16] %v313, 128
    %408 = vxpose.xlu0.b32.cont [3/16] %v327, 128
    %409 = vxpose.xlu0.b32.cont [4/16] %v341, 128
    %410 = vxpose.xlu0.b32.cont [5/16] %v355, 128
    %411 = vxpose.xlu0.b32.cont [6/16] %v369, 128
    %412 = vxpose.xlu0.b32.cont [7/16] %v383, 128
    %413 = vxpose.xlu0.b32.cont [8/16] %v397, 128
    %414 = vxpose.xlu0.b32.cont [9/16] 0.0, 128
    %415 = vxpose.xlu0.b32.cont [10/16] 0.0, 128
    %416 = vxpose.xlu0.b32.cont [11/16] 0.0, 128
    %417 = vxpose.xlu0.b32.cont [12/16] 0.0, 128
    %418 = vxpose.xlu0.b32.cont [13/16] 0.0, 128
    %419 = vxpose.xlu0.b32.cont [14/16] 0.0, 128
    %420 = vxpose.xlu0.b32.cont [15/16] 0.0, 128
    %421 = vxpose.xlu0.b32.end [16/16] 0.0, 128
    %v422 = vpop.trf.xlu0
    %v423 = vpop.trf.xlu0
    %v424 = vpop.trf.xlu0
    %v425 = vpop.trf.xlu0
    %v426 = vpop.trf.xlu0
    %v427 = vpop.trf.xlu0
    %v428 = vpop.trf.xlu0
    %v429 = vpop.trf.xlu0
    %v430 = vpop.trf.xlu0
    %v431 = vpop.trf.xlu0
    %v432 = vpop.trf.xlu0
    %v433 = vpop.trf.xlu0
    %v434 = vpop.trf.xlu0
    %v435 = vpop.trf.xlu0
    %v436 = vpop.trf.xlu0
    %v437 = vpop.trf.xlu0
    %vm438 = vcmask 523264
    %439 = vst.msk [vmem:[#allocation2] sm:$0xff] %vm438, %v422
    %440 = vst.msk [vmem:[#allocation2 + $0x8] sm:$0xff] %vm438, %v423
    %v441 = vld [vmem:[#allocation2] ss:$2 sm:$0xff]
    %s442 = scalar_lea.vmem [#allocation2], 1
    %v443 = vld [vmem:[%s442] ss:$2 sm:$0xff]
    %v444 = vmax.f32 %v441, %v443
    %445 = vxpose.xlu0.b32.start [1/16] %v444, 128
    %446 = vxpose.xlu0.b32.cont [2/16] 0.0, 128
    %447 = vxpose.xlu0.b32.cont [3/16] 0.0, 128
    %448 = vxpose.xlu0.b32.cont [4/16] 0.0, 128
    %449 = vxpose.xlu0.b32.cont [5/16] 0.0, 128
    %450 = vxpose.xlu0.b32.cont [6/16] 0.0, 128
    %451 = vxpose.xlu0.b32.cont [7/16] 0.0, 128
    %452 = vxpose.xlu0.b32.cont [8/16] 0.0, 128
    %453 = vxpose.xlu0.b32.cont [9/16] 0.0, 128
    %454 = vxpose.xlu0.b32.cont [10/16] 0.0, 128
    %455 = vxpose.xlu0.b32.cont [11/16] 0.0, 128
    %456 = vxpose.xlu0.b32.cont [12/16] 0.0, 128
    %457 = vxpose.xlu0.b32.cont [13/16] 0.0, 128
    %458 = vxpose.xlu0.b32.cont [14/16] 0.0, 128
    %459 = vxpose.xlu0.b32.cont [15/16] 0.0, 128
    %460 = vxpose.xlu0.b32.end [16/16] 0.0, 128
    %v461 = vpop.trf.xlu0
    %v462 = vpop.trf.xlu0
    %v463 = vpop.trf.xlu0
    %v464 = vpop.trf.xlu0
    %v465 = vpop.trf.xlu0
    %v466 = vpop.trf.xlu0
    %v467 = vpop.trf.xlu0
    %v468 = vpop.trf.xlu0
    %v469 = vpop.trf.xlu0
    %v470 = vpop.trf.xlu0
    %v471 = vpop.trf.xlu0
    %v472 = vpop.trf.xlu0
    %v473 = vpop.trf.xlu0
    %v474 = vpop.trf.xlu0
    %v475 = vpop.trf.xlu0
    %v476 = vpop.trf.xlu0
    %vm477 = vcmp.ge.f32.partialorder %v461, 0.0
    %vm478 = vcmp.ge.f32.partialorder %v462, 0.0
    %vm479 = vcmp.ge.f32.partialorder %v463, 0.0
    %vm480 = vcmp.ge.f32.partialorder %v464, 0.0
    %vm481 = vcmp.ge.f32.partialorder %v465, 0.0
    %vm482 = vcmp.ge.f32.partialorder %v466, 0.0
    %vm483 = vcmp.ge.f32.partialorder %v467, 0.0
    %vm484 = vcmp.ge.f32.partialorder %v468, 0.0
    %v485 = vmul.f32 %v461, 0.01
    %v486 = vmul.f32 %v462, 0.01
    %v487 = vmul.f32 %v463, 0.01
    %v488 = vmul.f32 %v464, 0.01
    %v489 = vmul.f32 %v465, 0.01
    %v490 = vmul.f32 %v466, 0.01
    %v491 = vmul.f32 %v467, 0.01
    %v492 = vmul.f32 %v468, 0.01
    %v493 = vsel %vm477, %v461, %v485
    %v494 = vsel %vm478, %v462, %v486
    %v495 = vsel %vm479, %v463, %v487
    %v496 = vsel %vm480, %v464, %v488
    %v497 = vsel %vm481, %v465, %v489
    %v498 = vsel %vm482, %v466, %v490
    %v499 = vsel %vm483, %v467, %v491
    %v500 = vsel %vm484, %v468, %v492
    %vm501 = vcmask 64512
    %502 = vst.msk [vmem:[#allocation6] sm:$0xff] %vm501, %v493
    %503 = vst.msk [vmem:[#allocation6 + $0x8] sm:$0xff] %vm501, %v494
    %504 = vst.msk [vmem:[#allocation6 + $0x10] sm:$0xff] %vm501, %v495
    %505 = vst.msk [vmem:[#allocation6 + $0x18] sm:$0xff] %vm501, %v496
    %506 = vst.msk [vmem:[#allocation6 + $0x20] sm:$0xff] %vm501, %v497
    %507 = vst.msk [vmem:[#allocation6 + $0x28] sm:$0xff] %vm501, %v498
    %508 = vst.msk [vmem:[#allocation6 + $0x30] sm:$0xff] %vm501, %v499
    %509 = vst.msk [vmem:[#allocation6 + $0x38] sm:$0xff] %vm501, %v500
    // Predicated region
    $region10: #{downsample_fused.1} parent=1 // pred_check
      _
    $region11: #{downsample_fused.1} parent=1 // pred_check_branch
      %511 = sbr.rel (0) target = $region13
    $region12: #{downsample_fused.1} parent=1 // pred_region
      %s513 = ssub.s32 1024, 1024
      %514 = vsyncadd [#allocation5], %s513
      %s515 = sshll.u32 [#allocation6], 4
      %s516 = int_to_ptr.vmem [resolvable:$true] %s515
      %521 = dma.vmem_to_hbm [thread:$0]  %s516, 1024, %s1, [#allocation5], 128, 128, 8
    $region13: #{downsample_fused.1} parent=1 // pred_fallthru
      _
    // Predicated region
    $region14: #{downsample_fused.1} parent=1 // pred_check
      _
    $region15: #{downsample_fused.1} parent=1 // pred_check_branch
      %523 = sbr.rel (0) target = $region17
    $region16: #{downsample_fused.1} parent=1 // pred_region
      %524 = dma.done [#allocation5], 1024
    $region17: #{downsample_fused.1} parent=1 // pred_fallthru
      _
    %525 = vsyncpa [#allocation4], 1
    %526 = vsyncpa [#allocation5], 1

// kernel: downsample_fallback.1
$region0: #{downsample_fallback.1}
  #allocation0 [shape = 'u32[]', space=smem, size = 0x4, offset = 0x4, fixed_abs, tag = 'smem constant byte address 0x4 - core index']
  #allocation1 [shape = 'u32[144,128]{1,0:T(1,128)}', space=vmem, size = 0x12000, scoped, tag = 'internal scratch']
  %s0 = inlined_call_operand.hbm [shape: f32[64,2,16], index: 0, kind: input, shape index: {}]
  %s1 = inlined_call_operand.vmem [shape: f32[64,16], index: 1, kind: output, shape index: {}]
  %s2 = sld [smem:[#allocation0]]
  $region18: #{downsample_fallback.1} parent=0
    _
  %s4 = ssub.s32 1, %s2
  %s5 = scalar_select 0, %s4, %s2
  $region1: #{downsample_fallback.1} parent=0
    #allocation2 [shape = 'u8[65536]{0}', space=vmem, size = 0x10000, scoped, tag = 'input window, operand 0, single buffered']
    #allocation3 [shape = 's32[1]{0}', space=sflag, size = 0x4, scoped, tag = 'scoped memory for downsample_fallback.1']
    %6 = vsyncpa [#allocation3], 0
    // Predicated region
    $region2: #{downsample_fallback.1} parent=1 // pred_check
      _
    $region3: #{downsample_fallback.1} parent=1 // pred_check_branch
      %8 = sbr.rel (0) target = $region5
    $region4: #{downsample_fallback.1} parent=1 // pred_region
      %s10 = ssub.s32 2048, 2048
      %11 = vsyncadd [#allocation3], %s10
      %s12 = sshll.u32 [#allocation2], 4
      %s13 = int_to_ptr.vmem [resolvable:$true] %s12
      %18 = dma.hbm_to_vmem [thread:$0]  %s0, 2048, %s13, [#allocation3], 32, 32, 2
    $region5: #{downsample_fallback.1} parent=1 // pred_fallthru
      _
    // Predicated region
    $region6: #{downsample_fallback.1} parent=1 // pred_check
      _
    $region7: #{downsample_fallback.1} parent=1 // pred_check_branch
      %20 = sbr.rel (0) target = $region9
    $region8: #{downsample_fallback.1} parent=1 // pred_region
      %21 = dma.done [#allocation3], 2048
    $region9: #{downsample_fallback.1} parent=1 // pred_fallthru
      _
    %v22 = vld [vmem:[#allocation2] sm:$0x1]
    %v23 = vld [vmem:[#allocation2 + $0x2] sm:$0x1]
    %v24 = vld [vmem:[#allocation2 + $0x4] sm:$0x1]
    %v25 = vld [vmem:[#allocation2 + $0x6] sm:$0x1]
    %v26 = vld [vmem:[#allocation2 + $0x8] sm:$0x1]
    %v27 = vld [vmem:[#allocation2 + $0xa] sm:$0x1]
    %v28 = vld [vmem:[#allocation2 + $0xc] sm:$0x1]
    %v29 = vld [vmem:[#allocation2 + $0xe] sm:$0x1]
    %v30 = vld [vmem:[#allocation2 + $0x10] sm:$0x1]
    %v31 = vld [vmem:[#allocation2 + $0x12] sm:$0x1]
    %v32 = vld [vmem:[#allocation2 + $0x14] sm:$0x1]
    %v33 = vld [vmem:[#allocation2 + $0x16] sm:$0x1]
    %v34 = vld [vmem:[#allocation2 + $0x18] sm:$0x1]
    %v35 = vld [vmem:[#allocation2 + $0x1a] sm:$0x1]
    %v36 = vld [vmem:[#allocation2 + $0x1c] sm:$0x1]
    %v37 = vld [vmem:[#allocation2 + $0x1e] sm:$0x1]
    %v38 = vld [vmem:[#allocation2 + $0x20] sm:$0x1]
    %v39 = vld [vmem:[#allocation2 + $0x22] sm:$0x1]
    %v40 = vld [vmem:[#allocation2 + $0x24] sm:$0x1]
    %v41 = vld [vmem:[#allocation2 + $0x26] sm:$0x1]
    %v42 = vld [vmem:[#allocation2 + $0x28] sm:$0x1]
    %v43 = vld [vmem:[#allocation2 + $0x2a] sm:$0x1]
    %v44 = vld [vmem:[#allocation2 + $0x2c] sm:$0x1]
    %v45 = vld [vmem:[#allocation2 + $0x2e] sm:$0x1]
    %v46 = vld [vmem:[#allocation2 + $0x30] sm:$0x1]
    %v47 = vld [vmem:[#allocation2 + $0x32] sm:$0x1]
    %v48 = vld [vmem:[#allocation2 + $0x34] sm:$0x1]
    %v49 = vld [vmem:[#allocation2 + $0x36] sm:$0x1]
    %v50 = vld [vmem:[#allocation2 + $0x38] sm:$0x1]
    %v51 = vld [vmem:[#allocation2 + $0x3a] sm:$0x1]
    %v52 = vld [vmem:[#allocation2 + $0x3c] sm:$0x1]
    %v53 = vld [vmem:[#allocation2 + $0x3e] sm:$0x1]
    %v54 = vld [vmem:[#allocation2 + $0x40] sm:$0x1]
    %v55 = vld [vmem:[#allocation2 + $0x42] sm:$0x1]
    %v56 = vld [vmem:[#allocation2 + $0x44] sm:$0x1]
    %v57 = vld [vmem:[#allocation2 + $0x46] sm:$0x1]
    %v58 = vld [vmem:[#allocation2 + $0x48] sm:$0x1]
    %v59 = vld [vmem:[#allocation2 + $0x4a] sm:$0x1]
    %v60 = vld [vmem:[#allocation2 + $0x4c] sm:$0x1]
    %v61 = vld [vmem:[#allocation2 + $0x4e] sm:$0x1]
    %v62 = vld [vmem:[#allocation2 + $0x50] sm:$0x1]
    %v63 = vld [vmem:[#allocation2 + $0x52] sm:$0x1]
    %v64 = vld [vmem:[#allocation2 + $0x54] sm:$0x1]
    %v65 = vld [vmem:[#allocation2 + $0x56] sm:$0x1]
    %v66 = vld [vmem:[#allocation2 + $0x58] sm:$0x1]
    %v67 = vld [vmem:[#allocation2 + $0x5a] sm:$0x1]
    %v68 = vld [vmem:[#allocation2 + $0x5c] sm:$0x1]
    %v69 = vld [vmem:[#allocation2 + $0x5e] sm:$0x1]
    %v70 = vld [vmem:[#allocation2 + $0x60] sm:$0x1]
    %v71 = vld [vmem:[#allocation2 + $0x62] sm:$0x1]
    %v72 = vld [vmem:[#allocation2 + $0x64] sm:$0x1]
    %v73 = vld [vmem:[#allocation2 + $0x66] sm:$0x1]
    %v74 = vld [vmem:[#allocation2 + $0x68] sm:$0x1]
    %v75 = vld [vmem:[#allocation2 + $0x6a] sm:$0x1]
    %v76 = vld [vmem:[#allocation2 + $0x6c] sm:$0x1]
    %v77 = vld [vmem:[#allocation2 + $0x6e] sm:$0x1]
    %v78 = vld [vmem:[#allocation2 + $0x70] sm:$0x1]
    %v79 = vld [vmem:[#allocation2 + $0x72] sm:$0x1]
    %v80 = vld [vmem:[#allocation2 + $0x74] sm:$0x1]
    %v81 = vld [vmem:[#allocation2 + $0x76] sm:$0x1]
    %v82 = vld [vmem:[#allocation2 + $0x78] sm:$0x1]
    %v83 = vld [vmem:[#allocation2 + $0x7a] sm:$0x1]
    %v84 = vld [vmem:[#allocation2 + $0x7c] sm:$0x1]
    %v85 = vld [vmem:[#allocation2 + $0x7e] sm:$0x1]
    %v86 = vld [vmem:[#allocation2 + $0x1] sm:$0x1]
    %v87 = vld [vmem:[#allocation2 + $0x3] sm:$0x1]
    %v88 = vld [vmem:[#allocation2 + $0x5] sm:$0x1]
    %v89 = vld [vmem:[#allocation2 + $0x7] sm:$0x1]
    %v90 = vld [vmem:[#allocation2 + $0x9] sm:$0x1]
    %v91 = vld [vmem:[#allocation2 + $0xb] sm:$0x1]
    %v92 = vld [vmem:[#allocation2 + $0xd] sm:$0x1]
    %v93 = vld [vmem:[#allocation2 + $0xf] sm:$0x1]
    %v94 = vld [vmem:[#allocation2 + $0x11] sm:$0x1]
    %v95 = vld [vmem:[#allocation2 + $0x13] sm:$0x1]
    %v96 = vld [vmem:[#allocation2 + $0x15] sm:$0x1]
    %v97 = vld [vmem:[#allocation2 + $0x17] sm:$0x1]
    %v98 = vld [vmem:[#allocation2 + $0x19] sm:$0x1]
    %v99 = vld [vmem:[#allocation2 + $0x1b] sm:$0x1]
    %v100 = vld [vmem:[#allocation2 + $0x1d] sm:$0x1]
    %v101 = vld [vmem:[#allocation2 + $0x1f] sm:$0x1]
    %v102 = vld [vmem:[#allocation2 + $0x21] sm:$0x1]
    %v103 = vld [vmem:[#allocation2 + $0x23] sm:$0x1]
    %v104 = vld [vmem:[#allocation2 + $0x25] sm:$0x1]
    %v105 = vld [vmem:[#allocation2 + $0x27] sm:$0x1]
    %v106 = vld [vmem:[#allocation2 + $0x29] sm:$0x1]
    %v107 = vld [vmem:[#allocation2 + $0x2b] sm:$0x1]
    %v108 = vld [vmem:[#allocation2 + $0x2d] sm:$0x1]
    %v109 = vld [vmem:[#allocation2 + $0x2f] sm:$0x1]
    %v110 = vld [vmem:[#allocation2 + $0x31] sm:$0x1]
    %v111 = vld [vmem:[#allocation2 + $0x33] sm:$0x1]
    %v112 = vld [vmem:[#allocation2 + $0x35] sm:$0x1]
    %v113 = vld [vmem:[#allocation2 + $0x37] sm:$0x1]
    %v114 = vld [vmem:[#allocation2 + $0x39] sm:$0x1]
    %v115 = vld [vmem:[#allocation2 + $0x3b] sm:$0x1]
    %v116 = vld [vmem:[#allocation2 + $0x3d] sm:$0x1]
    %v117 = vld [vmem:[#allocation2 + $0x3f] sm:$0x1]
    %v118 = vld [vmem:[#allocation2 + $0x41] sm:$0x1]
    %v119 = vld [vmem:[#allocation2 + $0x43] sm:$0x1]
    %v120 = vld [vmem:[#allocation2 + $0x45] sm:$0x1]
    %v121 = vld [vmem:[#allocation2 + $0x47] sm:$0x1]
    %v122 = vld [vmem:[#allocation2 + $0x49] sm:$0x1]
    %v123 = vld [vmem:[#allocation2 + $0x4b] sm:$0x1]
    %v124 = vld [vmem:[#allocation2 + $0x4d] sm:$0x1]
    %v125 = vld [vmem:[#allocation2 + $0x4f] sm:$0x1]
    %v126 = vld [vmem:[#allocation2 + $0x51] sm:$0x1]
    %v127 = vld [vmem:[#allocation2 + $0x53] sm:$0x1]
    %v128 = vld [vmem:[#allocation2 + $0x55] sm:$0x1]
    %v129 = vld [vmem:[#allocation2 + $0x57] sm:$0x1]
    %v130 = vld [vmem:[#allocation2 + $0x59] sm:$0x1]
    %v131 = vld [vmem:[#allocation2 + $0x5b] sm:$0x1]
    %v132 = vld [vmem:[#allocation2 + $0x5d] sm:$0x1]
    %v133 = vld [vmem:[#allocation2 + $0x5f] sm:$0x1]
    %v134 = vld [vmem:[#allocation2 + $0x61] sm:$0x1]
    %v135 = vld [vmem:[#allocation2 + $0x63] sm:$0x1]
    %v136 = vld [vmem:[#allocation2 + $0x65] sm:$0x1]
    %v137 = vld [vmem:[#allocation2 + $0x67] sm:$0x1]
    %v138 = vld [vmem:[#allocation2 + $0x69] sm:$0x1]
    %v139 = vld [vmem:[#allocation2 + $0x6b] sm:$0x1]
    %v140 = vld [vmem:[#allocation2 + $0x6d] sm:$0x1]
    %v141 = vld [vmem:[#allocation2 + $0x6f] sm:$0x1]
    %v142 = vld [vmem:[#allocation2 + $0x71] sm:$0x1]
    %v143 = vld [vmem:[#allocation2 + $0x73] sm:$0x1]
    %v144 = vld [vmem:[#allocation2 + $0x75] sm:$0x1]
    %v145 = vld [vmem:[#allocation2 + $0x77] sm:$0x1]
    %v146 = vld [vmem:[#allocation2 + $0x79] sm:$0x1]
    %v147 = vld [vmem:[#allocation2 + $0x7b] sm:$0x1]
    %v148 = vld [vmem:[#allocation2 + $0x7d] sm:$0x1]
    %v149 = vld [vmem:[#allocation2 + $0x7f] sm:$0x1]
    %v150 = vmax.f32 %v22, %v86
    %v151 = vmax.f32 %v23, %v87
    %v152 = vmax.f32 %v24, %v88
    %v153 = vmax.f32 %v25, %v89
    %v154 = vmax.f32 %v26, %v90
    %v155 = vmax.f32 %v27, %v91
    %v156 = vmax.f32 %v28, %v92
    %v157 = vmax.f32 %v29, %v93
    %v158 = vmax.f32 %v30, %v94
    %v159 = vmax.f32 %v31, %v95
    %v160 = vmax.f32 %v32, %v96
    %v161 = vmax.f32 %v33, %v97
    %v162 = vmax.f32 %v34, %v98
    %v163 = vmax.f32 %v35, %v99
    %v164 = vmax.f32 %v36, %v100
    %v165 = vmax.f32 %v37, %v101
    %v166 = vmax.f32 %v38, %v102
    %v167 = vmax.f32 %v39, %v103
    %v168 = vmax.f32 %v40, %v104
    %v169 = vmax.f32 %v41, %v105
    %v170 = vmax.f32 %v42, %v106
    %v171 = vmax.f32 %v43, %v107
    %v172 = vmax.f32 %v44, %v108
    %v173 = vmax.f32 %v45, %v109
    %v174 = vmax.f32 %v46, %v110
    %v175 = vmax.f32 %v47, %v111
    %v176 = vmax.f32 %v48, %v112
    %v177 = vmax.f32 %v49, %v113
    %v178 = vmax.f32 %v50, %v114
    %v179 = vmax.f32 %v51, %v115
    %v180 = vmax.f32 %v52, %v116
    %v181 = vmax.f32 %v53, %v117
    %v182 = vmax.f32 %v54, %v118
    %v183 = vmax.f32 %v55, %v119
    %v184 = vmax.f32 %v56, %v120
    %v185 = vmax.f32 %v57, %v121
    %v186 = vmax.f32 %v58, %v122
    %v187 = vmax.f32 %v59, %v123
    %v188 = vmax.f32 %v60, %v124
    %v189 = vmax.f32 %v61, %v125
    %v190 = vmax.f32 %v62, %v126
    %v191 = vmax.f32 %v63, %v127
    %v192 = vmax.f32 %v64, %v128
    %v193 = vmax.f32 %v65, %v129
    %v194 = vmax.f32 %v66, %v130
    %v195 = vmax.f32 %v67, %v131
    %v196 = vmax.f32 %v68, %v132
    %v197 = vmax.f32 %v69, %v133
    %v198 = vmax.f32 %v70, %v134
    %v199 = vmax.f32 %v71, %v135
    %v200 = vmax.f32 %v72, %v136
    %v201 = vmax.f32 %v73, %v137
    %v202 = vmax.f32 %v74, %v138
    %v203 = vmax.f32 %v75, %v139
    %v204 = vmax.f32 %v76, %v140
    %v205 = vmax.f32 %v77, %v141
    %v206 = vmax.f32 %v78, %v142
    %v207 = vmax.f32 %v79, %v143
    %v208 = vmax.f32 %v80, %v144
    %v209 = vmax.f32 %v81, %v145
    %v210 = vmax.f32 %v82, %v146
    %v211 = vmax.f32 %v83, %v147
    %v212 = vmax.f32 %v84, %v148
    %v213 = vmax.f32 %v85, %v149
    %vm214 = vcmp.ge.f32.partialorder %v150, 0.0
    %vm215 = vcmp.ge.f32.partialorder %v151, 0.0
    %vm216 = vcmp.ge.f32.partialorder %v152, 0.0
    %vm217 = vcmp.ge.f32.partialorder %v153, 0.0
    %vm218 = vcmp.ge.f32.partialorder %v154, 0.0
    %vm219 = vcmp.ge.f32.partialorder %v155, 0.0
    %vm220 = vcmp.ge.f32.partialorder %v156, 0.0
    %vm221 = vcmp.ge.f32.partialorder %v157, 0.0
    %vm222 = vcmp.ge.f32.partialorder %v158, 0.0
    %vm223 = vcmp.ge.f32.partialorder %v159, 0.0
    %vm224 = vcmp.ge.f32.partialorder %v160, 0.0
    %vm225 = vcmp.ge.f32.partialorder %v161, 0.0
    %vm226 = vcmp.ge.f32.partialorder %v162, 0.0
    %vm227 = vcmp.ge.f32.partialorder %v163, 0.0
    %vm228 = vcmp.ge.f32.partialorder %v164, 0.0
    %vm229 = vcmp.ge.f32.partialorder %v165, 0.0
    %vm230 = vcmp.ge.f32.partialorder %v166, 0.0
    %vm231 = vcmp.ge.f32.partialorder %v167, 0.0
    %vm232 = vcmp.ge.f32.partialorder %v168, 0.0
    %vm233 = vcmp.ge.f32.partialorder %v169, 0.0
    %vm234 = vcmp.ge.f32.partialorder %v170, 0.0
    %vm235 = vcmp.ge.f32.partialorder %v171, 0.0
    %vm236 = vcmp.ge.f32.partialorder %v172, 0.0
    %vm237 = vcmp.ge.f32.partialorder %v173, 0.0
    %vm238 = vcmp.ge.f32.partialorder %v174, 0.0
    %vm239 = vcmp.ge.f32.partialorder %v175, 0.0
    %vm240 = vcmp.ge.f32.partialorder %v176, 0.0
    %vm241 = vcmp.ge.f32.partialorder %v177, 0.0
    %vm242 = vcmp.ge.f32.partialorder %v178, 0.0
    %vm243 = vcmp.ge.f32.partialorder %v179, 0.0
    %vm244 = vcmp.ge.f32.partialorder %v180, 0.0
    %vm245 = vcmp.ge.f32.partialorder %v181, 0.0
    %vm246 = vcmp.ge.f32.partialorder %v182, 0.0
    %vm247 = vcmp.ge.f32.partialorder %v183, 0.0
    %vm248 = vcmp.ge.f32.partialorder %v184, 0.0
    %vm249 = vcmp.ge.f32.partialorder %v185, 0.0
    %vm250 = vcmp.ge.f32.partialorder %v186, 0.0
    %vm251 = vcmp.ge.f32.partialorder %v187, 0.0
    %vm252 = vcmp.ge.f32.partialorder %v188, 0.0
    %vm253 = vcmp.ge.f32.partialorder %v189, 0.0
    %vm254 = vcmp.ge.f32.partialorder %v190, 0.0
    %vm255 = vcmp.ge.f32.partialorder %v191, 0.0
    %vm256 = vcmp.ge.f32.partialorder %v192, 0.0
    %vm257 = vcmp.ge.f32.partialorder %v193, 0.0
    %vm258 = vcmp.ge.f32.partialorder %v194, 0.0
    %vm259 = vcmp.ge.f32.partialorder %v195, 0.0
    %vm260 = vcmp.ge.f32.partialorder %v196, 0.0
    %vm261 = vcmp.ge.f32.partialorder %v197, 0.0
    %vm262 = vcmp.ge.f32.partialorder %v198, 0.0
    %vm263 = vcmp.ge.f32.partialorder %v199, 0.0
    %vm264 = vcmp.ge.f32.partialorder %v200, 0.0
    %vm265 = vcmp.ge.f32.partialorder %v201, 0.0
    %vm266 = vcmp.ge.f32.partialorder %v202, 0.0
    %vm267 = vcmp.ge.f32.partialorder %v203, 0.0
    %vm268 = vcmp.ge.f32.partialorder %v204, 0.0
    %vm269 = vcmp.ge.f32.partialorder %v205, 0.0
    %vm270 = vcmp.ge.f32.partialorder %v206, 0.0
    %vm271 = vcmp.ge.f32.partialorder %v207, 0.0
    %vm272 = vcmp.ge.f32.partialorder %v208, 0.0
    %vm273 = vcmp.ge.f32.partialorder %v209, 0.0
    %vm274 = vcmp.ge.f32.partialorder %v210, 0.0
    %vm275 = vcmp.ge.f32.partialorder %v211, 0.0
    %vm276 = vcmp.ge.f32.partialorder %v212, 0.0
    %vm277 = vcmp.ge.f32.partialorder %v213, 0.0
    %v278 = vmul.f32 %v150, 0.01
    %v279 = vmul.f32 %v151, 0.01
    %v280 = vmul.f32 %v152, 0.01
    %v281 = vmul.f32 %v153, 0.01
    %v282 = vmul.f32 %v154, 0.01
    %v283 = vmul.f32 %v155, 0.01
    %v284 = vmul.f32 %v156, 0.01
    %v285 = vmul.f32 %v157, 0.01
    %v286 = vmul.f32 %v158, 0.01
    %v287 = vmul.f32 %v159, 0.01
    %v288 = vmul.f32 %v160, 0.01
    %v289 = vmul.f32 %v161, 0.01
    %v290 = vmul.f32 %v162, 0.01
    %v291 = vmul.f32 %v163, 0.01
    %v292 = vmul.f32 %v164, 0.01
    %v293 = vmul.f32 %v165, 0.01
    %v294 = vmul.f32 %v166, 0.01
    %v295 = vmul.f32 %v167, 0.01
    %v296 = vmul.f32 %v168, 0.01
    %v297 = vmul.f32 %v169, 0.01
    %v298 = vmul.f32 %v170, 0.01
    %v299 = vmul.f32 %v171, 0.01
    %v300 = vmul.f32 %v172, 0.01
    %v301 = vmul.f32 %v173, 0.01
    %v302 = vmul.f32 %v174, 0.01
    %v303 = vmul.f32 %v175, 0.01
    %v304 = vmul.f32 %v176, 0.01
    %v305 = vmul.f32 %v177, 0.01
    %v306 = vmul.f32 %v178, 0.01
    %v307 = vmul.f32 %v179, 0.01
    %v308 = vmul.f32 %v180, 0.01
    %v309 = vmul.f32 %v181, 0.01
    %v310 = vmul.f32 %v182, 0.01
    %v311 = vmul.f32 %v183, 0.01
    %v312 = vmul.f32 %v184, 0.01
    %v313 = vmul.f32 %v185, 0.01
    %v314 = vmul.f32 %v186, 0.01
    %v315 = vmul.f32 %v187, 0.01
    %v316 = vmul.f32 %v188, 0.01
    %v317 = vmul.f32 %v189, 0.01
    %v318 = vmul.f32 %v190, 0.01
    %v319 = vmul.f32 %v191, 0.01
    %v320 = vmul.f32 %v192, 0.01
    %v321 = vmul.f32 %v193, 0.01
    %v322 = vmul.f32 %v194, 0.01
    %v323 = vmul.f32 %v195, 0.01
    %v324 = vmul.f32 %v196, 0.01
    %v325 = vmul.f32 %v197, 0.01
    %v326 = vmul.f32 %v198, 0.01
    %v327 = vmul.f32 %v199, 0.01
    %v328 = vmul.f32 %v200, 0.01
    %v329 = vmul.f32 %v201, 0.01
    %v330 = vmul.f32 %v202, 0.01
    %v331 = vmul.f32 %v203, 0.01
    %v332 = vmul.f32 %v204, 0.01
    %v333 = vmul.f32 %v205, 0.01
    %v334 = vmul.f32 %v206, 0.01
    %v335 = vmul.f32 %v207, 0.01
    %v336 = vmul.f32 %v208, 0.01
    %v337 = vmul.f32 %v209, 0.01
    %v338 = vmul.f32 %v210, 0.01
    %v339 = vmul.f32 %v211, 0.01
    %v340 = vmul.f32 %v212, 0.01
    %v341 = vmul.f32 %v213, 0.01
    %v342 = vsel %vm214, %v150, %v278
    %v343 = vsel %vm215, %v151, %v279
    %v344 = vsel %vm216, %v152, %v280
    %v345 = vsel %vm217, %v153, %v281
    %v346 = vsel %vm218, %v154, %v282
    %v347 = vsel %vm219, %v155, %v283
    %v348 = vsel %vm220, %v156, %v284
    %v349 = vsel %vm221, %v157, %v285
    %v350 = vsel %vm222, %v158, %v286
    %v351 = vsel %vm223, %v159, %v287
    %v352 = vsel %vm224, %v160, %v288
    %v353 = vsel %vm225, %v161, %v289
    %v354 = vsel %vm226, %v162, %v290
    %v355 = vsel %vm227, %v163, %v291
    %v356 = vsel %vm228, %v164, %v292
    %v357 = vsel %vm229, %v165, %v293
    %v358 = vsel %vm230, %v166, %v294
    %v359 = vsel %vm231, %v167, %v295
    %v360 = vsel %vm232, %v168, %v296
    %v361 = vsel %vm233, %v169, %v297
    %v362 = vsel %vm234, %v170, %v298
    %v363 = vsel %vm235, %v171, %v299
    %v364 = vsel %vm236, %v172, %v300
    %v365 = vsel %vm237, %v173, %v301
    %v366 = vsel %vm238, %v174, %v302
    %v367 = vsel %vm239, %v175, %v303
    %v368 = vsel %vm240, %v176, %v304
    %v369 = vsel %vm241, %v177, %v305
    %v370 = vsel %vm242, %v178, %v306
    %v371 = vsel %vm243, %v179, %v307
    %v372 = vsel %vm244, %v180, %v308
    %v373 = vsel %vm245, %v181, %v309
    %v374 = vsel %vm246, %v182, %v310
    %v375 = vsel %vm247, %v183, %v311
    %v376 = vsel %vm248, %v184, %v312
    %v377 = vsel %vm249, %v185, %v313
    %v378 = vsel %vm250, %v186, %v314
    %v379 = vsel %vm251, %v187, %v315
    %v380 = vsel %vm252, %v188, %v316
    %v381 = vsel %vm253, %v189, %v317
    %v382 = vsel %vm254, %v190, %v318
    %v383 = vsel %vm255, %v191, %v319
    %v384 = vsel %vm256, %v192, %v320
    %v385 = vsel %vm257, %v193, %v321
    %v386 = vsel %vm258, %v194, %v322
    %v387 = vsel %vm259, %v195, %v323
    %v388 = vsel %vm260, %v196, %v324
    %v389 = vsel %vm261, %v197, %v325
    %v390 = vsel %vm262, %v198, %v326
    %v391 = vsel %vm263, %v199, %v327
    %v392 = vsel %vm264, %v200, %v328
    %v393 = vsel %vm265, %v201, %v329
    %v394 = vsel %vm266, %v202, %v330
    %v395 = vsel %vm267, %v203, %v331
    %v396 = vsel %vm268, %v204, %v332
    %v397 = vsel %vm269, %v205, %v333
    %v398 = vsel %vm270, %v206, %v334
    %v399 = vsel %vm271, %v207, %v335
    %v400 = vsel %vm272, %v208, %v336
    %v401 = vsel %vm273, %v209, %v337
    %v402 = vsel %vm274, %v210, %v338
    %v403 = vsel %vm275, %v211, %v339
    %v404 = vsel %vm276, %v212, %v340
    %v405 = vsel %vm277, %v213, %v341
    %v470 = vrot.slane %v343, 7
    %vm471 = vcmask 1041409
    %v472 = vsel %vm471, %v470, %v342
    %v473 = vrot.slane %v344, 6
    %vm474 = vcmask 1042434
    %v475 = vsel %vm474, %v473, %v472
    %v476 = vrot.slane %v345, 5
    %vm477 = vcmask 1043459
    %v478 = vsel %vm477, %v476, %v475
    %v479 = vrot.slane %v346, 4
    %vm480 = vcmask 1044484
    %v481 = vsel %vm480, %v479, %v478
    %v482 = vrot.slane %v347, 3
    %vm483 = vcmask 1045509
    %v484 = vsel %vm483, %v482, %v481
    %v485 = vrot.slane %v348, 2
    %vm486 = vcmask 1046534
    %v487 = vsel %vm486, %v485, %v484
    %v488 = vrot.slane %v349, 1
    %vm489 = vcmask 1047559
    %v490 = vsel %vm489, %v488, %v487
    %v491 = vrot.slane %v351, 7
    %v492 = vsel %vm471, %v491, %v350
    %v493 = vrot.slane %v352, 6
    %v494 = vsel %vm474, %v493, %v492
    %v495 = vrot.slane %v353, 5
    %v496 = vsel %vm477, %v495, %v494
    %v497 = vrot.slane %v354, 4
    %v498 = vsel %vm480, %v497, %v496
    %v499 = vrot.slane %v355, 3
    %v500 = vsel %vm483, %v499, %v498
    %v501 = vrot.slane %v356, 2
    %v502 = vsel %vm486, %v501, %v500
    %v503 = vrot.slane %v357, 1
    %v504 = vsel %vm489, %v503, %v502
    %v505 = vrot.slane %v359, 7
    %v506 = vsel %vm471, %v505, %v358
    %v507 = vrot.slane %v360, 6
    %v508 = vsel %vm474, %v507, %v506
    %v509 = vrot.slane %v361, 5
    %v510 = vsel %vm477, %v509, %v508
    %v511 = vrot.slane %v362, 4
    %v512 = vsel %vm480, %v511, %v510
    %v513 = vrot.slane %v363, 3
    %v514 = vsel %vm483, %v513, %v512
    %v515 = vrot.slane %v364, 2
    %v516 = vsel %vm486, %v515, %v514
    %v517 = vrot.slane %v365, 1
    %v518 = vsel %vm489, %v517, %v516
    %v519 = vrot.slane %v367, 7
    %v520 = vsel %vm471, %v519, %v366
    %v521 = vrot.slane %v368, 6
    %v522 = vsel %vm474, %v521, %v520
    %v523 = vrot.slane %v369, 5
    %v524 = vsel %vm477, %v523, %v522
    %v525 = vrot.slane %v370, 4
    %v526 = vsel %vm480, %v525, %v524
    %v527 = vrot.slane %v371, 3
    %v528 = vsel %vm483, %v527, %v526
    %v529 = vrot.slane %v372, 2
    %v530 = vsel %vm486, %v529, %v528
    %v531 = vrot.slane %v373, 1
    %v532 = vsel %vm489, %v531, %v530
    %v533 = vrot.slane %v375, 7
    %v534 = vsel %vm471, %v533, %v374
    %v535 = vrot.slane %v376, 6
    %v536 = vsel %vm474, %v535, %v534
    %v537 = vrot.slane %v377, 5
    %v538 = vsel %vm477, %v537, %v536
    %v539 = vrot.slane %v378, 4
    %v540 = vsel %vm480, %v539, %v538
    %v541 = vrot.slane %v379, 3
    %v542 = vsel %vm483, %v541, %v540
    %v543 = vrot.slane %v380, 2
    %v544 = vsel %vm486, %v543, %v542
    %v545 = vrot.slane %v381, 1
    %v546 = vsel %vm489, %v545, %v544
    %v547 = vrot.slane %v383, 7
    %v548 = vsel %vm471, %v547, %v382
    %v549 = vrot.slane %v384, 6
    %v550 = vsel %vm474, %v549, %v548
    %v551 = vrot.slane %v385, 5
    %v552 = vsel %vm477, %v551, %v550
    %v553 = vrot.slane %v386, 4
    %v554 = vsel %vm480, %v553, %v552
    %v555 = vrot.slane %v387, 3
    %v556 = vsel %vm483, %v555, %v554
    %v557 = vrot.slane %v388, 2
    %v558 = vsel %vm486, %v557, %v556
    %v559 = vrot.slane %v389, 1
    %v560 = vsel %vm489, %v559, %v558
    %v561 = vrot.slane %v391, 7
    %v562 = vsel %vm471, %v561, %v390
    %v563 = vrot.slane %v392, 6
    %v564 = vsel %vm474, %v563, %v562
    %v565 = vrot.slane %v393, 5
    %v566 = vsel %vm477, %v565, %v564
    %v567 = vrot.slane %v394, 4
    %v568 = vsel %vm480, %v567, %v566
    %v569 = vrot.slane %v395, 3
    %v570 = vsel %vm483, %v569, %v568
    %v571 = vrot.slane %v396, 2
    %v572 = vsel %vm486, %v571, %v570
    %v573 = vrot.slane %v397, 1
    %v574 = vsel %vm489, %v573, %v572
    %v575 = vrot.slane %v399, 7
    %v576 = vsel %vm471, %v575, %v398
    %v577 = vrot.slane %v400, 6
    %v578 = vsel %vm474, %v577, %v576
    %v579 = vrot.slane %v401, 5
    %v580 = vsel %vm477, %v579, %v578
    %v581 = vrot.slane %v402, 4
    %v582 = vsel %vm480, %v581, %v580
    %v583 = vrot.slane %v403, 3
    %v584 = vsel %vm483, %v583, %v582
    %v585 = vrot.slane %v404, 2
    %v586 = vsel %vm486, %v585, %v584
    %v587 = vrot.slane %v405, 1
    %v588 = vsel %vm489, %v587, %v586
    %vm597 = vcmask 130048
    %598 = vst.msk [vmem:[%s1] sm:$0xff] %vm597, %v490
    %599 = vst.msk [vmem:[%s1 + $0x8] sm:$0xff] %vm597, %v504
    %600 = vst.msk [vmem:[%s1 + $0x10] sm:$0xff] %vm597, %v518
    %601 = vst.msk [vmem:[%s1 + $0x18] sm:$0xff] %vm597, %v532
    %602 = vst.msk [vmem:[%s1 + $0x20] sm:$0xff] %vm597, %v546
    %603 = vst.msk [vmem:[%s1 + $0x28] sm:$0xff] %vm597, %v560
    %604 = vst.msk [vmem:[%s1 + $0x30] sm:$0xff] %vm597, %v574
    %605 = vst.msk [vmem:[%s1 + $0x38] sm:$0xff] %vm597, %v588
    // Predicated region
    $region10: #{downsample_fallback.1} parent=1 // pred_check
      _
    $region11: #{downsample_fallback.1} parent=1 // pred_check_branch
      %607 = sbr.rel (0) target = $region13
    $region12: #{downsample_fallback.1} parent=1 // pred_region
      _
    $region13: #{downsample_fallback.1} parent=1 // pred_fallthru
      _
    // Predicated region
    $region14: #{downsample_fallback.1} parent=1 // pred_check
      _
    $region15: #{downsample_fallback.1} parent=1 // pred_check_branch
      %609 = sbr.rel (0) target = $region17
    $region16: #{downsample_fallback.1} parent=1 // pred_region
      _
    $region17: #{downsample_fallback.1} parent=1 // pred_fallthru
      _
    %610 = vsyncpa [#allocation3], 1

</llo_original>
